<compile_context>
chip_gen: v7x
topology: tpu7x:2x2x1
jax: 0.10.0
libtpu: 0.0.40
codegen_flags: <defaults>
</compile_context>

<pallas_src>
import functools

import jax
import jax.numpy as jnp
from jax import lax
from jax.experimental import pallas as pl
from jax.experimental.pallas import tpu as pltpu


HIDDEN = 128


def _round_up(v, m):
    return ((v + m - 1) // m) * m


def actor_kernel(x_ref, w1_ref, b1_ref, wh_ref, bh_ref, out_ref, *,
                 bound, n_action, act_dtype):
    # Hidden layer: Linear(n_states -> 128) + ReLU (torch applies ReLU twice; idempotent).
    h = jnp.dot(x_ref[...], w1_ref[...], preferred_element_type=jnp.float32)
    h = jnp.maximum(h + b1_ref[...], 0.0)

    # Fused heads: single MXU pass over the lane-padded [128, N_PAD] weight.
    head = jnp.dot(h, wh_ref[...], preferred_element_type=jnp.float32) + bh_ref[...]

    # Element-wise stage (tanh / softplus).  act_dtype=bf16 halves EUP cost on
    # v6e/v7x at ~1e-3 accuracy; default f32 keeps full precision (and v5e path).
    ha = head.astype(act_dtype)
    mu = (bound * jnp.tanh(ha)).astype(jnp.float32)
    # Numerically-stable softplus (matches F.softplus to <1e-8 in f32).
    sigma = (jnp.maximum(ha, 0) + jnp.log1p(jnp.exp(-jnp.abs(ha)))).astype(jnp.float32)

    # Columns [0, n_action) hold mu, [n_action, 2*n_action) hold sigma; remaining
    # lanes are zero-padded weights and get discarded by the wrapper slice.
    lane = lax.broadcasted_iota(jnp.int32, head.shape, 1)
    out_ref[...] = jnp.where(lane < n_action, mu, sigma)


def fuse_heads(wmu, bmu, wsig, bsig):
    """One-time, parameter-static fusion of the two heads into a lane-dense weight."""
    n_action = wmu.shape[1]
    n_pad = max(128, _round_up(2 * n_action, 128))
    w_heads = jnp.zeros((HIDDEN, n_pad), jnp.float32)
    w_heads = w_heads.at[:, :n_action].set(wmu)
    w_heads = w_heads.at[:, n_action:2 * n_action].set(wsig)
    b_heads = jnp.zeros((1, n_pad), jnp.float32)
    b_heads = b_heads.at[:, :n_action].set(bmu)
    b_heads = b_heads.at[:, n_action:2 * n_action].set(bsig)
    return w_heads, b_heads


def _pick_tile(B, tile_b):
    """Batch tile: large enough to amortize ~0.35us/step overhead, multiple of 8,
    and (for big B) an even number of tiles so v7x's 2 TensorCores share the grid."""
    if tile_b is not None:
        if B < 8:
            return B                                   # full-extent block, always legal
        return max(8, (min(tile_b, _round_up(B, 8)) // 8) * 8)
    if B <= 512:
        return B                                       # single full-extent tile
    TILE_CAP = 4096
    n_tiles = _round_up(max(2, pl.cdiv(B, TILE_CAP)), 2)
    return min(_round_up(pl.cdiv(B, n_tiles), 8), TILE_CAP)


def actor_forward(x, w1, b1, w_heads, b_heads, *, bound, n_action,
                  tile_b=None, act_dtype=jnp.float32):
    B, n_states = x.shape
    n_pad = w_heads.shape[1]

    tb = _pick_tile(B, tile_b)
    grid = (pl.cdiv(B, tb),)

    # Real double-buffered footprint: 2x x-tile + 2x out-tile + resident weights,
    # plus ~2 MiB headroom; capped at 56 MiB so it fits v7x's 64 MiB VMEM.
    vmem_bytes = 4 * (
        2 * tb * n_states                              # x tiles (double-buffered)
        + 2 * tb * n_pad                               # out tiles (double-buffered)
        + (n_states * HIDDEN + HIDDEN                  # W1, b1 (resident)
           + HIDDEN * n_pad + n_pad)                   # W_heads, b_heads (resident)
    )
    vmem_limit = min(max(vmem_bytes + (2 << 20), 16 << 20), 56 << 20)

    kernel = functools.partial(actor_kernel, bound=float(bound),
                               n_action=int(n_action), act_dtype=act_dtype)

    out = pl.pallas_call(
        kernel,
        out_shape=jax.ShapeDtypeStruct((B, n_pad), jnp.float32),
        grid=grid,
        in_specs=[
            pl.BlockSpec((tb, n_states), lambda i: (i, 0)),      # x: streamed per tile
            pl.BlockSpec((n_states, HIDDEN), lambda i: (0, 0)),  # W1: VMEM-resident
            pl.BlockSpec((1, HIDDEN), lambda i: (0, 0)),         # b1: VMEM-resident
            pl.BlockSpec((HIDDEN, n_pad), lambda i: (0, 0)),     # W_heads: VMEM-resident
            pl.BlockSpec((1, n_pad), lambda i: (0, 0)),          # b_heads: VMEM-resident
        ],
        out_specs=pl.BlockSpec((tb, n_pad), lambda i: (i, 0)),
        compiler_params=pltpu.CompilerParams(
            dimension_semantics=("parallel",),
            vmem_limit_bytes=int(vmem_limit),
        ),
    )(x, w1, b1, w_heads, b_heads)

    # Single slice of the useful columns; mu/sigma split fuses under jit.
    useful = out[:, :2 * n_action]
    return useful[:, :n_action], useful[:, n_action:]


def init_params(key, n_states, n_action):
    # Mimics torch.nn.Linear default init: U(-1/sqrt(fan_in), +1/sqrt(fan_in)).
    ks = jax.random.split(key, 6)

    def lin(kw, kb, fan_in, fan_out):
        bnd = 1.0 / jnp.sqrt(jnp.float32(fan_in))
        w = jax.random.uniform(kw, (fan_in, fan_out), jnp.float32, -bnd, bnd)
        b = jax.random.uniform(kb, (1, fan_out), jnp.float32, -bnd, bnd)
        return w, b

    w1, b1 = lin(ks[0], ks[1], n_states, HIDDEN)
    wmu, bmu = lin(ks[2], ks[3], HIDDEN, n_action)
    wsig, bsig = lin(ks[4], ks[5], HIDDEN, n_action)
    return w1, b1, wmu, bmu, wsig, bsig


def reference_forward(x, w1, b1, wmu, bmu, wsig, bsig, bound):
    h = jnp.maximum(x @ w1 + b1, 0.0)
    mu = bound * jnp.tanh(h @ wmu + bmu)
    sigma = jax.nn.softplus(h @ wsig + bsig)
    return mu, sigma


if __name__ == "__main__":
    n_states, n_action, bound = 32, 4, 2.0

    key = jax.random.PRNGKey(0)
    k_x1, k_x2, k_p = jax.random.split(key, 3)
    params = init_params(k_p, n_states, n_action)
    w1, b1, wmu, bmu, wsig, bsig = params

    # One-time head fusion (parameter-static, hoisted out of the forward pass).
    w_heads, b_heads = fuse_heads(wmu, bmu, wsig, bsig)

    fwd = jax.jit(actor_forward,
                  static_argnames=("bound", "n_action", "tile_b", "act_dtype"))

    # Small single-tile case (grid of 1, full-extent batch block).
    x1 = jax.random.normal(k_x1, (8, n_states), jnp.float32)
    mu1, sig1 = fwd(x1, w1, b1, w_heads, b_heads, bound=bound, n_action=n_action)
    jax.block_until_ready((mu1, sig1))
    mu1_ref, sig1_ref = reference_forward(x1, *params, bound)
    assert mu1.shape == (8, n_action) and sig1.shape == (8, n_action)
    assert jnp.allclose(mu1, mu1_ref, atol=1e-5, rtol=1e-5)
    assert jnp.allclose(sig1, sig1_ref, atol=1e-5, rtol=1e-5)

    # Multi-tile case: B not a multiple of the tile -> exercises the partial
    # edge block (no wrapper padding) and a grid of 4.
    x2 = jax.random.normal(k_x2, (200, n_states), jnp.float32)
    mu2, sig2 = fwd(x2, w1, b1, w_heads, b_heads, bound=bound, n_action=n_action,
                    tile_b=64)
    jax.block_until_ready((mu2, sig2))
    mu2_ref, sig2_ref = reference_forward(x2, *params, bound)
    assert mu2.shape == (200, n_action) and sig2.shape == (200, n_action)
    assert jnp.allclose(mu2, mu2_ref, atol=1e-5, rtol=1e-5)
    assert jnp.allclose(sig2, sig2_ref, atol=1e-5, rtol=1e-5)

    print("KERNEL_OK")
</pallas_src>

<mosaic_0001>
module attributes {stable_mosaic.version = 11 : i64} {
  func.func @actor_kernel(%arg0: i32, %arg1: memref<8x32xf32, #tpu.memory_space<vmem>>, %arg2: memref<32x128xf32, #tpu.memory_space<vmem>>, %arg3: memref<1x128xf32, #tpu.memory_space<vmem>>, %arg4: memref<128x128xf32, #tpu.memory_space<vmem>>, %arg5: memref<1x128xf32, #tpu.memory_space<vmem>>, %arg6: memref<8x128xf32, #tpu.memory_space<vmem>>) attributes {dimension_semantics = [#tpu.dimension_semantics<parallel>], iteration_bounds = array<i64: 1>, scalar_prefetch = 0 : i64, scratch_operands = 0 : i64, tpu.core_type = #tpu.core_type<tc>, window_params = [{transform_indices = @transform_0, window_bounds = array<i64: 8, 32>}, {pipeline_mode = #tpu.pipeline_mode<synchronous>, transform_indices = @transform_1, window_bounds = array<i64: 32, 128>}, {pipeline_mode = #tpu.pipeline_mode<synchronous>, transform_indices = @transform_2, window_bounds = array<i64: 1, 128>}, {pipeline_mode = #tpu.pipeline_mode<synchronous>, transform_indices = @transform_3, window_bounds = array<i64: 128, 128>}, {pipeline_mode = #tpu.pipeline_mode<synchronous>, transform_indices = @transform_4, window_bounds = array<i64: 1, 128>}, {transform_indices = @transform_5, window_bounds = array<i64: 8, 128>}]} {
    %c0 = arith.constant 0 : index
    %c0_0 = arith.constant 0 : index
    %0 = vector.load %arg1[%c0, %c0_0] : memref<8x32xf32, #tpu.memory_space<vmem>>, vector<8x32xf32>
    %c0_1 = arith.constant 0 : index
    %c0_2 = arith.constant 0 : index
    %1 = vector.load %arg2[%c0_1, %c0_2] : memref<32x128xf32, #tpu.memory_space<vmem>>, vector<32x128xf32>
    %cst = arith.constant dense<0.000000e+00> : vector<8x128xf32>
    %2 = tpu.matmul %0, %1, %cst {dimension_numbers = #tpu.dot_dimension_numbers<[1], [0], [0], [1], [0, 0, 1, 1], [], []>} : vector<8x32xf32>, vector<32x128xf32>, vector<8x128xf32> -> vector<8x128xf32>
    %c0_3 = arith.constant 0 : index
    %c0_4 = arith.constant 0 : index
    %3 = vector.load %arg3[%c0_3, %c0_4] : memref<1x128xf32, #tpu.memory_space<vmem>>, vector<1x128xf32>
    %4 = vector.broadcast %3 : vector<1x128xf32> to vector<8x128xf32>
    %5 = arith.addf %2, %4 : vector<8x128xf32>
    %cst_5 = arith.constant 0.000000e+00 : f32
    %6 = vector.broadcast %cst_5 : f32 to vector<8x128xf32>
    %7 = arith.maximumf %5, %6 : vector<8x128xf32>
    %c0_6 = arith.constant 0 : index
    %c0_7 = arith.constant 0 : index
    %8 = vector.load %arg4[%c0_6, %c0_7] : memref<128x128xf32, #tpu.memory_space<vmem>>, vector<128x128xf32>
    %cst_8 = arith.constant dense<0.000000e+00> : vector<8x128xf32>
    %9 = tpu.matmul %7, %8, %cst_8 {dimension_numbers = #tpu.dot_dimension_numbers<[1], [0], [0], [1], [0, 0, 1, 1], [], []>} : vector<8x128xf32>, vector<128x128xf32>, vector<8x128xf32> -> vector<8x128xf32>
    %c0_9 = arith.constant 0 : index
    %c0_10 = arith.constant 0 : index
    %10 = vector.load %arg5[%c0_9, %c0_10] : memref<1x128xf32, #tpu.memory_space<vmem>>, vector<1x128xf32>
    %11 = vector.broadcast %10 : vector<1x128xf32> to vector<8x128xf32>
    %12 = arith.addf %9, %11 : vector<8x128xf32>
    %13 = math.tanh %12 : vector<8x128xf32>
    %cst_11 = arith.constant 2.000000e+00 : f32
    %14 = vector.broadcast %cst_11 : f32 to vector<8x128xf32>
    %15 = arith.mulf %14, %13 : vector<8x128xf32>
    %cst_12 = arith.constant 0.000000e+00 : f32
    %16 = vector.broadcast %cst_12 : f32 to vector<8x128xf32>
    %17 = arith.maximumf %12, %16 : vector<8x128xf32>
    %18 = math.absf %12 : vector<8x128xf32>
    %cst_13 = arith.constant 0.000000e+00 : f32
    %19 = vector.broadcast %cst_13 : f32 to vector<8x128xf32>
    %20 = arith.subf %19, %18 : vector<8x128xf32>
    %21 = math.exp %20 : vector<8x128xf32>
    %22 = math.log1p %21 : vector<8x128xf32>
    %23 = arith.addf %17, %22 : vector<8x128xf32>
    %24 = tpu.iota {dimensions = array<i32: 1>} : vector<8x128xi32>
    %c4_i32 = arith.constant 4 : i32
    %25 = vector.broadcast %c4_i32 : i32 to vector<8x128xi32>
    %26 = arith.cmpi slt, %24, %25 : vector<8x128xi32>
    %27 = arith.select %26, %15, %23 : vector<8x128xi1>, vector<8x128xf32>
    %c0_14 = arith.constant 0 : index
    %c0_15 = arith.constant 0 : index
    %28 = vector.load %arg6[%c0_14, %c0_15] : memref<8x128xf32, #tpu.memory_space<vmem>>, vector<8x128xf32>
    tpu.vector_store %arg6[%c0_14, %c0_15], %27 {strides = array<i32>} : memref<8x128xf32, #tpu.memory_space<vmem>>, vector<8x128xf32>,
    return
  }
  func.func @transform_0(%arg0: i32) -> (i32, i32) {
    %c0_i32 = arith.constant 0 : i32
    %c0_i32_0 = arith.constant 0 : i32
    return %arg0, %c0_i32 : i32, i32
  }
  func.func @transform_1(%arg0: i32) -> (i32, i32) {
    %c0_i32 = arith.constant 0 : i32
    %c0_i32_0 = arith.constant 0 : i32
    %c0_i32_1 = arith.constant 0 : i32
    return %c0_i32, %c0_i32_0 : i32, i32
  }
  func.func @transform_2(%arg0: i32) -> (i32, i32) {
    %c0_i32 = arith.constant 0 : i32
    %c0_i32_0 = arith.constant 0 : i32
    %c0_i32_1 = arith.constant 0 : i32
    return %c0_i32, %c0_i32_0 : i32, i32
  }
  func.func @transform_3(%arg0: i32) -> (i32, i32) {
    %c0_i32 = arith.constant 0 : i32
    %c0_i32_0 = arith.constant 0 : i32
    %c0_i32_1 = arith.constant 0 : i32
    return %c0_i32, %c0_i32_0 : i32, i32
  }
  func.func @transform_4(%arg0: i32) -> (i32, i32) {
    %c0_i32 = arith.constant 0 : i32
    %c0_i32_0 = arith.constant 0 : i32
    %c0_i32_1 = arith.constant 0 : i32
    return %c0_i32, %c0_i32_0 : i32, i32
  }
  func.func @transform_5(%arg0: i32) -> (i32, i32) {
    %c0_i32 = arith.constant 0 : i32
    %c0_i32_0 = arith.constant 0 : i32
    return %arg0, %c0_i32 : i32, i32
  }
}

</mosaic_0001>

<llo_original>
// kernel: actor_forward.1
$region0: #{actor_forward.1}
  #allocation0 [shape = 'u32[]', space=smem, size = 0x4, offset = 0x4, fixed_abs, tag = 'smem constant byte address 0x4 - core index']
  #allocation1 [shape = 'u32[144,128]{1,0:T(1,128)}', space=vmem, size = 0x12000, scoped, tag = 'internal scratch']
  %s0 = inlined_call_operand.hbm [shape: f32[8,32], index: 0, kind: input, shape index: {}]
  %s1 = inlined_call_operand.hbm [shape: f32[32,128], index: 1, kind: input, shape index: {}]
  %s2 = inlined_call_operand.vmem [shape: f32[1,128], index: 2, kind: input, shape index: {}]
  %s3 = inlined_call_operand.hbm [shape: f32[128,128], index: 3, kind: input, shape index: {}]
  %s4 = inlined_call_operand.vmem [shape: f32[1,128], index: 4, kind: input, shape index: {}]
  %s5 = inlined_call_operand.vmem [shape: f32[8,128], index: 5, kind: output, shape index: {}]
  %s6 = sld [smem:[#allocation0]]
  $region42: #{actor_forward.1} parent=0
    _
  %s8 = ssub.s32 1, %s6
  %s9 = scalar_select 0, %s8, %s6
  $region1: #{actor_forward.1} parent=0
    #allocation2 [shape = 'u8[4096]{0}', space=vmem, size = 0x1000, scoped, tag = 'input window, operand 0, single buffered']
    #allocation3 [shape = 's32[1]{0}', space=sflag, size = 0x4, scoped, tag = 'scoped memory for actor_forward.1']
    #allocation4 [shape = 'u8[16384]{0}', space=vmem, size = 0x4000, scoped, tag = 'input window, operand 1, single buffered']
    #allocation5 [shape = 's32[1]{0}', space=sflag, size = 0x4, scoped, tag = 'scoped memory for actor_forward.1']
    #allocation6 [shape = 'u8[65536]{0}', space=vmem, size = 0x10000, scoped, tag = 'input window, operand 3, single buffered']
    %10 = vsyncpa [#allocation3], 0
    %11 = vsyncpa [#allocation5], 0
    // Predicated region
    $region2: #{actor_forward.1} parent=1 // pred_check
      _
    $region3: #{actor_forward.1} parent=1 // pred_check_branch
      %13 = sbr.rel (0) target = $region5
    $region4: #{actor_forward.1} parent=1 // pred_region
      %s15 = ssub.s32 128, 128
      %16 = vsyncadd [#allocation3], %s15
      %s18 = sshll.u32 [#allocation2], 4
      %s19 = int_to_ptr.vmem [resolvable:$true] %s18
      %21 = dma.hbm_to_vmem [thread:$0]  %s0, 128, %s19, [#allocation3]
    $region5: #{actor_forward.1} parent=1 // pred_fallthru
      _
    // Predicated region
    $region6: #{actor_forward.1} parent=1 // pred_check
      _
    $region7: #{actor_forward.1} parent=1 // pred_check_branch
      %23 = sbr.rel (0) target = $region9
    $region8: #{actor_forward.1} parent=1 // pred_region
      %s25 = ssub.s32 512, 512
      %26 = vsyncadd [#allocation5], %s25
      %s27 = sshll.u32 [#allocation4], 4
      %s28 = int_to_ptr.vmem [resolvable:$true] %s27
      %33 = dma.hbm_to_vmem [thread:$0]  %s1, 512, %s28, [#allocation5], 128, 128, 8
    $region9: #{actor_forward.1} parent=1 // pred_fallthru
      _
    // Predicated region
    $region10: #{actor_forward.1} parent=1 // pred_check
      _
    $region11: #{actor_forward.1} parent=1 // pred_check_branch
      %35 = sbr.rel (0) target = $region13
    $region12: #{actor_forward.1} parent=1 // pred_region
      _
    $region13: #{actor_forward.1} parent=1 // pred_fallthru
      _
    // Predicated region
    $region14: #{actor_forward.1} parent=1 // pred_check
      _
    $region15: #{actor_forward.1} parent=1 // pred_check_branch
      %37 = sbr.rel (0) target = $region17
    $region16: #{actor_forward.1} parent=1 // pred_region
      %s39 = ssub.s32 2048, 2048
      %40 = vsyncadd [#allocation5], %s39
      %s41 = sshll.u32 [#allocation6], 4
      %s42 = int_to_ptr.vmem [resolvable:$true] %s41
      %47 = dma.hbm_to_vmem [thread:$0]  %s3, 2048, %s42, [#allocation5], 128, 128, 8
    $region17: #{actor_forward.1} parent=1 // pred_fallthru
      _
    // Predicated region
    $region18: #{actor_forward.1} parent=1 // pred_check
      _
    $region19: #{actor_forward.1} parent=1 // pred_check_branch
      %49 = sbr.rel (0) target = $region21
    $region20: #{actor_forward.1} parent=1 // pred_region
      _
    $region21: #{actor_forward.1} parent=1 // pred_fallthru
      _
    // Predicated region
    $region22: #{actor_forward.1} parent=1 // pred_check
      _
    $region23: #{actor_forward.1} parent=1 // pred_check_branch
      %51 = sbr.rel (0) target = $region25
    $region24: #{actor_forward.1} parent=1 // pred_region
      %52 = dma.done [#allocation3], 128
    $region25: #{actor_forward.1} parent=1 // pred_fallthru
      _
    // Predicated region
    $region26: #{actor_forward.1} parent=1 // pred_check
      _
    $region27: #{actor_forward.1} parent=1 // pred_check_branch
      %54 = sbr.rel (0) target = $region29
    $region28: #{actor_forward.1} parent=1 // pred_region
      %55 = dma.done [#allocation5], 512
    $region29: #{actor_forward.1} parent=1 // pred_fallthru
      _
    // Predicated region
    $region30: #{actor_forward.1} parent=1 // pred_check
      _
    $region31: #{actor_forward.1} parent=1 // pred_check_branch
      %57 = sbr.rel (0) target = $region33
    $region32: #{actor_forward.1} parent=1 // pred_region
      %58 = dma.done [#allocation5], 2048
    $region33: #{actor_forward.1} parent=1 // pred_fallthru
      _
    %v59 = vld [vmem:[#allocation2] sm:$0xff]
    %v60 = vld [vmem:[#allocation4] sm:$0xff]
    %v61 = vld [vmem:[#allocation4 + $0x8] sm:$0xff]
    %v62 = vld [vmem:[#allocation4 + $0x10] sm:$0xff]
    %v63 = vld [vmem:[#allocation4 + $0x18] sm:$0xff]
    %v64 = vld [vmem:[%s2] sm:$0x1]
    %v66 = vlaneseq
    %v67 = vshrl.u32 %v66, 7
    %v68 = vsub.s32 0, %v67
    %v69 = vrot.slane %v64, %v68
    %vm71 = vcmask 261120
    %v73 = vsel %vm71, %v59, 0
    %75 = vmatprep.subr.mxu0 0.0
    %76 = vmatpush1.msra.mxu0 %v60
    %77 = vmatprep.subr.mxu0 0.0
    %78 = vmatpush1.msra.mxu0 %v61
    %79 = vmatprep.subr.mxu0 0.0
    %80 = vmatpush1.msra.mxu0 %v62
    %81 = vmatprep.subr.mxu0 0.0
    %82 = vmatpush1.msra.mxu0 %v63
    %83 = vmatprep.subr.mxu0 0.0
    %84 = vmatpush1.msra.mxu0 0.0
    %85 = vmatprep.subr.mxu0 0.0
    %86 = vmatpush1.msra.mxu0 0.0
    %87 = vmatprep.subr.mxu0 0.0
    %88 = vmatpush1.msra.mxu0 0.0
    %89 = vmatprep.subr.mxu0 0.0
    %90 = vmatpush1.msra.mxu0 0.0
    %91 = vmatprep.subr.mxu0 0.0
    %92 = vmatpush1.msra.mxu0 0.0
    %93 = vmatprep.subr.mxu0 0.0
    %94 = vmatpush1.msra.mxu0 0.0
    %95 = vmatprep.subr.mxu0 0.0
    %96 = vmatpush1.msra.mxu0 0.0
    %97 = vmatprep.subr.mxu0 0.0
    %98 = vmatpush1.msra.mxu0 0.0
    %99 = vmatprep.subr.mxu0 0.0
    %100 = vmatpush1.msra.mxu0 0.0
    %101 = vmatprep.subr.mxu0 0.0
    %102 = vmatpush1.msra.mxu0 0.0
    %103 = vmatprep.subr.mxu0 0.0
    %104 = vmatpush1.msra.mxu0 0.0
    %105 = vmatprep.subr.mxu0 0.0
    %106 = vmatpush1.msra.mxu0 0.0
    %107 = vmatprep.subr.mxu0 0.0
    %108 = vmatpush1.msra.mxu0 0.0
    %109 = vmatprep.subr.mxu0 0.0
    %110 = vmatpush1.msra.mxu0 0.0
    %111 = vmatprep.subr.mxu0 0.0
    %112 = vmatpush1.msra.mxu0 0.0
    %113 = vmatprep.subr.mxu0 0.0
    %114 = vmatpush1.msra.mxu0 0.0
    %115 = vmatprep.subr.mxu0 0.0
    %116 = vmatpush1.msra.mxu0 0.0
    %117 = vmatprep.subr.mxu0 0.0
    %118 = vmatpush1.msra.mxu0 0.0
    %119 = vmatprep.subr.mxu0 0.0
    %120 = vmatpush1.msra.mxu0 0.0
    %121 = vmatprep.subr.mxu0 0.0
    %122 = vmatpush1.msra.mxu0 0.0
    %123 = vmatprep.subr.mxu0 0.0
    %124 = vmatpush1.msra.mxu0 0.0
    %125 = vmatprep.subr.mxu0 0.0
    %126 = vmatpush1.msra.mxu0 0.0
    %127 = vmatprep.subr.mxu0 0.0
    %128 = vmatpush1.msra.mxu0 0.0
    %129 = vmatprep.subr.mxu0 0.0
    %130 = vmatpush1.msra.mxu0 0.0
    %131 = vmatprep.subr.mxu0 0.0
    %132 = vmatpush1.msra.mxu0 0.0
    %133 = vmatprep.subr.mxu0 0.0
    %134 = vmatpush1.msra.mxu0 0.0
    %135 = vmatprep.subr.mxu0 0.0
    %136 = vmatpush1.msra.mxu0 0.0
    %137 = vmatprep.subr.mxu0 0.0
    %138 = vmatpush1.msra.mxu0 0.0
    %139 = vmatprep.mubr.f32.mxu0 0.0
    %140 = vmatmul.mubr.f32.gmra.mrb[0].mxu0 %v73
    %v141 = vpop.f32.mrb[0].mxu0
    %v142 = vadd.f32 %v69, %v141
    %v143 = vpop.f32.mrb[0].mxu0
    %144 = vdwg.mxu0
    %v145 = vmax.f32 %v142, 0.0
    %v146 = vld [vmem:[#allocation6] sm:$0xff]
    %v147 = vld [vmem:[#allocation6 + $0x8] sm:$0xff]
    %v148 = vld [vmem:[#allocation6 + $0x10] sm:$0xff]
    %v149 = vld [vmem:[#allocation6 + $0x18] sm:$0xff]
    %v150 = vld [vmem:[#allocation6 + $0x20] sm:$0xff]
    %v151 = vld [vmem:[#allocation6 + $0x28] sm:$0xff]
    %v152 = vld [vmem:[#allocation6 + $0x30] sm:$0xff]
    %v153 = vld [vmem:[#allocation6 + $0x38] sm:$0xff]
    %v154 = vld [vmem:[#allocation6 + $0x40] sm:$0xff]
    %v155 = vld [vmem:[#allocation6 + $0x48] sm:$0xff]
    %v156 = vld [vmem:[#allocation6 + $0x50] sm:$0xff]
    %v157 = vld [vmem:[#allocation6 + $0x58] sm:$0xff]
    %v158 = vld [vmem:[#allocation6 + $0x60] sm:$0xff]
    %v159 = vld [vmem:[#allocation6 + $0x68] sm:$0xff]
    %v160 = vld [vmem:[#allocation6 + $0x70] sm:$0xff]
    %v161 = vld [vmem:[#allocation6 + $0x78] sm:$0xff]
    %v162 = vld [vmem:[%s4] sm:$0x1]
    %v164 = vlaneseq
    %v165 = vshrl.u32 %v164, 7
    %v166 = vsub.s32 0, %v165
    %v167 = vrot.slane %v162, %v166
    %169 = vmatprep.subr.mxu0 0.0
    %170 = vmatpush1.msra.mxu0 %v146
    %171 = vmatprep.subr.mxu0 0.0
    %172 = vmatpush1.msra.mxu0 %v147
    %173 = vmatprep.subr.mxu0 0.0
    %174 = vmatpush1.msra.mxu0 %v148
    %175 = vmatprep.subr.mxu0 0.0
    %176 = vmatpush1.msra.mxu0 %v149
    %177 = vmatprep.subr.mxu0 0.0
    %178 = vmatpush1.msra.mxu0 %v150
    %179 = vmatprep.subr.mxu0 0.0
    %180 = vmatpush1.msra.mxu0 %v151
    %181 = vmatprep.subr.mxu0 0.0
    %182 = vmatpush1.msra.mxu0 %v152
    %183 = vmatprep.subr.mxu0 0.0
    %184 = vmatpush1.msra.mxu0 %v153
    %185 = vmatprep.subr.mxu0 0.0
    %186 = vmatpush1.msra.mxu0 %v154
    %187 = vmatprep.subr.mxu0 0.0
    %188 = vmatpush1.msra.mxu0 %v155
    %189 = vmatprep.subr.mxu0 0.0
    %190 = vmatpush1.msra.mxu0 %v156
    %191 = vmatprep.subr.mxu0 0.0
    %192 = vmatpush1.msra.mxu0 %v157
    %193 = vmatprep.subr.mxu0 0.0
    %194 = vmatpush1.msra.mxu0 %v158
    %195 = vmatprep.subr.mxu0 0.0
    %196 = vmatpush1.msra.mxu0 %v159
    %197 = vmatprep.subr.mxu0 0.0
    %198 = vmatpush1.msra.mxu0 %v160
    %199 = vmatprep.subr.mxu0 0.0
    %200 = vmatpush1.msra.mxu0 %v161
    %201 = vmatprep.subr.mxu0 0.0
    %202 = vmatpush1.msra.mxu0 0.0
    %203 = vmatprep.subr.mxu0 0.0
    %204 = vmatpush1.msra.mxu0 0.0
    %205 = vmatprep.subr.mxu0 0.0
    %206 = vmatpush1.msra.mxu0 0.0
    %207 = vmatprep.subr.mxu0 0.0
    %208 = vmatpush1.msra.mxu0 0.0
    %209 = vmatprep.subr.mxu0 0.0
    %210 = vmatpush1.msra.mxu0 0.0
    %211 = vmatprep.subr.mxu0 0.0
    %212 = vmatpush1.msra.mxu0 0.0
    %213 = vmatprep.subr.mxu0 0.0
    %214 = vmatpush1.msra.mxu0 0.0
    %215 = vmatprep.subr.mxu0 0.0
    %216 = vmatpush1.msra.mxu0 0.0
    %217 = vmatprep.subr.mxu0 0.0
    %218 = vmatpush1.msra.mxu0 0.0
    %219 = vmatprep.subr.mxu0 0.0
    %220 = vmatpush1.msra.mxu0 0.0
    %221 = vmatprep.subr.mxu0 0.0
    %222 = vmatpush1.msra.mxu0 0.0
    %223 = vmatprep.subr.mxu0 0.0
    %224 = vmatpush1.msra.mxu0 0.0
    %225 = vmatprep.subr.mxu0 0.0
    %226 = vmatpush1.msra.mxu0 0.0
    %227 = vmatprep.subr.mxu0 0.0
    %228 = vmatpush1.msra.mxu0 0.0
    %229 = vmatprep.subr.mxu0 0.0
    %230 = vmatpush1.msra.mxu0 0.0
    %231 = vmatprep.subr.mxu0 0.0
    %232 = vmatpush1.msra.mxu0 0.0
    %233 = vmatprep.mubr.f32.mxu0 0.0
    %234 = vmatmul.mubr.f32.gmra.mrb[0].mxu0 %v145
    %v235 = vpop.f32.mrb[0].mxu0
    %v236 = vadd.f32 %v167, %v235
    %v237 = vpop.f32.mrb[0].mxu0
    %238 = vdwg.mxu0
    %v239 = vtanh.pop %v236
    %v240 = vmul.f32 %v239, 2.0
    %v241 = vmax.f32 %v236, 0.0
    %v242 = vand.u32 2147483647, %v236
    %v243 = vsub.f32 0.0, %v242
    %v244 = vmul.f32 %v243, 1.442695
    %v245 = vpow.pop %v244
    %v246 = vadd.f32 %v245, 1.0
    %v247 = vlog2.pop %v246
    %v248 = vmul.f32 %v247, 0.6931472
    %v249 = vmul.f32 -0.5, %v245
    %v250 = vadd.f32 %v249, 1.0
    %v251 = vmul.f32 %v250, %v245
    %v252 = vand.u32 2147483647, %v245
    %vm253 = vcmp.lt.f32.partialorder %v252, 0.0004427343
    %v254 = vsel %vm253, %v251, %v248
    %v255 = vadd.f32 %v241, %v254
    %v256 = vlaneseq
    %v257 = vand.u32 %v256, 127
    %vm258 = vcmp.lt.s32.totalorder %v257, 4
    %v259 = vsel %vm258, %v240, %v255
    %260 = vst [vmem:[%s5] sm:$0xff] %v259
    // Predicated region
    $region34: #{actor_forward.1} parent=1 // pred_check
      _
    $region35: #{actor_forward.1} parent=1 // pred_check_branch
      %262 = sbr.rel (0) target = $region37
    $region36: #{actor_forward.1} parent=1 // pred_region
      _
    $region37: #{actor_forward.1} parent=1 // pred_fallthru
      _
    // Predicated region
    $region38: #{actor_forward.1} parent=1 // pred_check
      _
    $region39: #{actor_forward.1} parent=1 // pred_check_branch
      %264 = sbr.rel (0) target = $region41
    $region40: #{actor_forward.1} parent=1 // pred_region
      _
    $region41: #{actor_forward.1} parent=1 // pred_fallthru
      _
    %265 = vsyncpa [#allocation3], 1
    %266 = vsyncpa [#allocation5], 1

</llo_original>
